<compile_context>
chip_gen: v5e
topology: v5e:2x2
jax: 0.10.0
libtpu: 0.0.40
codegen_flags: <defaults>
</compile_context>

<pallas_src>
import math

import jax
import jax.numpy as jnp
from jax.experimental import pallas as pl
from jax.experimental.pallas import tpu as pltpu

LANE = 128          # pad every feature dim to a multiple of 128 (not 256: v5e)
TILE_B = 128        # batch rows per grid step (multiple of 8)


def _round_up(n, m):
    return ((n + m - 1) // m) * m


# ----------------------------- Pallas kernel --------------------------------
def mlp_kernel(x_ref,
               w1_ref, b1_ref,
               w2_ref, b2_ref,
               w3_ref, b3_ref,
               w4_ref, b4_ref,
               o_ref):
    """One (TILE_B, 128) batch tile through the full MLP.

    Weights (bf16) and biases (f32) are VMEM-resident across all grid steps.
    Activations stay f32 on the VPU/EUP; only the MXU inputs are bf16.
    """
    h = x_ref[...]  # f32 (TILE_B, 128)

    # Hidden layers: Linear + ReLU  (bf16 MXU inputs, f32 accumulation).
    for w_ref, b_ref in ((w1_ref, b1_ref), (w2_ref, b2_ref), (w3_ref, b3_ref)):
        h = jnp.dot(h.astype(jnp.bfloat16), w_ref[...],
                    preferred_element_type=jnp.float32) + b_ref[...]
        h = jnp.maximum(h, 0.0)

    # Output layer: Linear + Sigmoid (EUP).
    z = jnp.dot(h.astype(jnp.bfloat16), w4_ref[...],
                preferred_element_type=jnp.float32) + b4_ref[...]
    o_ref[...] = jax.nn.sigmoid(z)


# ------------------------------ Wrapper --------------------------------------
def mlp_forward(x, params, out_dim, *, tile_b=TILE_B):
    """x: [batch, input_size] f32.

    params: [(w, b)] with w bf16 [in_pad, out_pad] and b f32 [1, out_pad],
    all already zero-padded to multiples of 128.
    Returns f32 [batch, out_dim].
    """
    batch, in_dim = x.shape
    in_pad = params[0][0].shape[0]
    out_pad = params[-1][0].shape[1]

    # Pad batch (to a tile multiple) and input features (to 128) with zeros.
    b_pad = _round_up(max(batch, 1), tile_b)
    xp = jnp.zeros((b_pad, in_pad), jnp.float32).at[:batch, :in_dim].set(x)

    grid = (b_pad // tile_b,)

    # x / out stream tile-by-tile; weights & biases use a constant index_map so
    # they are DMA'd once and stay resident in VMEM (~130 KB total).
    in_specs = [pl.BlockSpec((tile_b, in_pad), lambda i: (i, 0))]
    flat_args = [xp]
    for w, b in params:
        in_specs.append(pl.BlockSpec(w.shape, lambda i: (0, 0)))
        in_specs.append(pl.BlockSpec(b.shape, lambda i: (0, 0)))
        flat_args += [w, b]
    out_specs = pl.BlockSpec((tile_b, out_pad), lambda i: (i, 0))

    yp = pl.pallas_call(
        mlp_kernel,
        out_shape=jax.ShapeDtypeStruct((b_pad, out_pad), jnp.float32),
        grid=grid,
        in_specs=in_specs,
        out_specs=out_specs,
        compiler_params=pltpu.CompilerParams(
            dimension_semantics=("parallel",)),  # v7x: shard batch tiles over 2 TCs
    )(*flat_args)

    # Strip batch padding and the zero-padded output lanes.
    return yp[:batch, :out_dim]


# --------------------------- Parameter setup ---------------------------------
def make_params(key, input_size, hidden_size, output_size):
    """PyTorch nn.Linear default init, pre-transposed to [in, out], then
    zero-padded to 128-lane multiples. Weights bf16, biases f32 [1, out_pad]."""
    dims = [input_size] + list(hidden_size) + [output_size]
    params = []
    for i in range(len(dims) - 1):
        fan_in, fan_out = dims[i], dims[i + 1]
        key, kw, kb = jax.random.split(key, 3)
        bound = 1.0 / math.sqrt(fan_in)
        w = jax.random.uniform(kw, (fan_in, fan_out), jnp.float32, -bound, bound)
        b = jax.random.uniform(kb, (fan_out,), jnp.float32, -bound, bound)

        in_pad = _round_up(fan_in, LANE)
        out_pad = _round_up(fan_out, LANE)
        w_pad = jnp.zeros((in_pad, out_pad), jnp.float32).at[:fan_in, :fan_out].set(w)
        b_pad = jnp.zeros((1, out_pad), jnp.float32).at[0, :fan_out].set(b)

        params.append((w_pad.astype(jnp.bfloat16), b_pad))
    return params


# ------------------------- Pure-JAX reference ---------------------------------
def reference_forward(x, params, out_dim):
    """Mirrors the kernel math (same padded bf16 weights, f32 accumulation)."""
    batch, in_dim = x.shape
    in_pad = params[0][0].shape[0]
    h = jnp.zeros((batch, in_pad), jnp.float32).at[:, :in_dim].set(x)
    for i, (w, b) in enumerate(params):
        h = jnp.dot(h.astype(jnp.bfloat16), w,
                    preferred_element_type=jnp.float32) + b
        if i != len(params) - 1:
            h = jnp.maximum(h, 0.0)
        else:
            h = jax.nn.sigmoid(h)
    return h[:, :out_dim]


# --------------------------------- Main ---------------------------------------
if __name__ == "__main__":
    key = jax.random.PRNGKey(0)
    key, kx = jax.random.split(key)

    input_size, output_size = 8, 4
    hidden_size = [80, 57, 40]          # MLP(8, [80, 57, 40], 4, 0, ReLU, Sigmoid)
    batch = 256                         # many evaluations amortized into one call

    x = jax.random.normal(kx, (batch, input_size), jnp.float32)
    params = make_params(key, input_size, hidden_size, output_size)

    out = mlp_forward(x, params, output_size)
    out = jax.block_until_ready(out)

    ref = reference_forward(x, params, output_size)
    assert out.shape == (batch, output_size)
    assert bool(jnp.all(jnp.isfinite(out)))
    assert jnp.allclose(out, ref, atol=1e-3, rtol=1e-3), "mismatch vs reference"

    print("KERNEL_OK")
</pallas_src>

<mosaic_0001>
module attributes {stable_mosaic.version = 11 : i64} {
  func.func @mlp_kernel(%arg0: i32, %arg1: memref<128x128xf32, #tpu.memory_space<vmem>>, %arg2: memref<128x128xbf16, #tpu.memory_space<vmem>>, %arg3: memref<1x128xf32, #tpu.memory_space<vmem>>, %arg4: memref<128x128xbf16, #tpu.memory_space<vmem>>, %arg5: memref<1x128xf32, #tpu.memory_space<vmem>>, %arg6: memref<128x128xbf16, #tpu.memory_space<vmem>>, %arg7: memref<1x128xf32, #tpu.memory_space<vmem>>, %arg8: memref<128x128xbf16, #tpu.memory_space<vmem>>, %arg9: memref<1x128xf32, #tpu.memory_space<vmem>>, %arg10: memref<128x128xf32, #tpu.memory_space<vmem>>) attributes {dimension_semantics = [#tpu.dimension_semantics<parallel>], iteration_bounds = array<i64: 2>, scalar_prefetch = 0 : i64, scratch_operands = 0 : i64, tpu.core_type = #tpu.core_type<tc>, window_params = [{transform_indices = @transform_0, window_bounds = array<i64: 128, 128>}, {pipeline_mode = #tpu.pipeline_mode<synchronous>, transform_indices = @transform_1, window_bounds = array<i64: 128, 128>}, {pipeline_mode = #tpu.pipeline_mode<synchronous>, transform_indices = @transform_2, window_bounds = array<i64: 1, 128>}, {pipeline_mode = #tpu.pipeline_mode<synchronous>, transform_indices = @transform_3, window_bounds = array<i64: 128, 128>}, {pipeline_mode = #tpu.pipeline_mode<synchronous>, transform_indices = @transform_4, window_bounds = array<i64: 1, 128>}, {pipeline_mode = #tpu.pipeline_mode<synchronous>, transform_indices = @transform_5, window_bounds = array<i64: 128, 128>}, {pipeline_mode = #tpu.pipeline_mode<synchronous>, transform_indices = @transform_6, window_bounds = array<i64: 1, 128>}, {pipeline_mode = #tpu.pipeline_mode<synchronous>, transform_indices = @transform_7, window_bounds = array<i64: 128, 128>}, {pipeline_mode = #tpu.pipeline_mode<synchronous>, transform_indices = @transform_8, window_bounds = array<i64: 1, 128>}, {transform_indices = @transform_9, window_bounds = array<i64: 128, 128>}]} {
    %c0 = arith.constant 0 : index
    %c0_0 = arith.constant 0 : index
    %0 = vector.load %arg1[%c0, %c0_0] : memref<128x128xf32, #tpu.memory_space<vmem>>, vector<128x128xf32>
    %1 = arith.truncf %0 : vector<128x128xf32> to vector<128x128xbf16>
    %c0_1 = arith.constant 0 : index
    %c0_2 = arith.constant 0 : index
    %2 = vector.load %arg2[%c0_1, %c0_2] : memref<128x128xbf16, #tpu.memory_space<vmem>>, vector<128x128xbf16>
    %cst = arith.constant dense<0.000000e+00> : vector<128x128xf32>
    %3 = tpu.matmul %1, %2, %cst {dimension_numbers = #tpu.dot_dimension_numbers<[1], [0], [0], [1], [0, 0, 1, 1], [], []>} : vector<128x128xbf16>, vector<128x128xbf16>, vector<128x128xf32> -> vector<128x128xf32>
    %c0_3 = arith.constant 0 : index
    %c0_4 = arith.constant 0 : index
    %4 = vector.load %arg3[%c0_3, %c0_4] : memref<1x128xf32, #tpu.memory_space<vmem>>, vector<1x128xf32>
    %5 = vector.broadcast %4 : vector<1x128xf32> to vector<128x128xf32>
    %6 = arith.addf %3, %5 : vector<128x128xf32>
    %cst_5 = arith.constant 0.000000e+00 : f32
    %7 = vector.broadcast %cst_5 : f32 to vector<128x128xf32>
    %8 = arith.maximumf %6, %7 : vector<128x128xf32>
    %9 = arith.truncf %8 : vector<128x128xf32> to vector<128x128xbf16>
    %c0_6 = arith.constant 0 : index
    %c0_7 = arith.constant 0 : index
    %10 = vector.load %arg4[%c0_6, %c0_7] : memref<128x128xbf16, #tpu.memory_space<vmem>>, vector<128x128xbf16>
    %cst_8 = arith.constant dense<0.000000e+00> : vector<128x128xf32>
    %11 = tpu.matmul %9, %10, %cst_8 {dimension_numbers = #tpu.dot_dimension_numbers<[1], [0], [0], [1], [0, 0, 1, 1], [], []>} : vector<128x128xbf16>, vector<128x128xbf16>, vector<128x128xf32> -> vector<128x128xf32>
    %c0_9 = arith.constant 0 : index
    %c0_10 = arith.constant 0 : index
    %12 = vector.load %arg5[%c0_9, %c0_10] : memref<1x128xf32, #tpu.memory_space<vmem>>, vector<1x128xf32>
    %13 = vector.broadcast %12 : vector<1x128xf32> to vector<128x128xf32>
    %14 = arith.addf %11, %13 : vector<128x128xf32>
    %cst_11 = arith.constant 0.000000e+00 : f32
    %15 = vector.broadcast %cst_11 : f32 to vector<128x128xf32>
    %16 = arith.maximumf %14, %15 : vector<128x128xf32>
    %17 = arith.truncf %16 : vector<128x128xf32> to vector<128x128xbf16>
    %c0_12 = arith.constant 0 : index
    %c0_13 = arith.constant 0 : index
    %18 = vector.load %arg6[%c0_12, %c0_13] : memref<128x128xbf16, #tpu.memory_space<vmem>>, vector<128x128xbf16>
    %cst_14 = arith.constant dense<0.000000e+00> : vector<128x128xf32>
    %19 = tpu.matmul %17, %18, %cst_14 {dimension_numbers = #tpu.dot_dimension_numbers<[1], [0], [0], [1], [0, 0, 1, 1], [], []>} : vector<128x128xbf16>, vector<128x128xbf16>, vector<128x128xf32> -> vector<128x128xf32>
    %c0_15 = arith.constant 0 : index
    %c0_16 = arith.constant 0 : index
    %20 = vector.load %arg7[%c0_15, %c0_16] : memref<1x128xf32, #tpu.memory_space<vmem>>, vector<1x128xf32>
    %21 = vector.broadcast %20 : vector<1x128xf32> to vector<128x128xf32>
    %22 = arith.addf %19, %21 : vector<128x128xf32>
    %cst_17 = arith.constant 0.000000e+00 : f32
    %23 = vector.broadcast %cst_17 : f32 to vector<128x128xf32>
    %24 = arith.maximumf %22, %23 : vector<128x128xf32>
    %25 = arith.truncf %24 : vector<128x128xf32> to vector<128x128xbf16>
    %c0_18 = arith.constant 0 : index
    %c0_19 = arith.constant 0 : index
    %26 = vector.load %arg8[%c0_18, %c0_19] : memref<128x128xbf16, #tpu.memory_space<vmem>>, vector<128x128xbf16>
    %cst_20 = arith.constant dense<0.000000e+00> : vector<128x128xf32>
    %27 = tpu.matmul %25, %26, %cst_20 {dimension_numbers = #tpu.dot_dimension_numbers<[1], [0], [0], [1], [0, 0, 1, 1], [], []>} : vector<128x128xbf16>, vector<128x128xbf16>, vector<128x128xf32> -> vector<128x128xf32>
    %c0_21 = arith.constant 0 : index
    %c0_22 = arith.constant 0 : index
    %28 = vector.load %arg9[%c0_21, %c0_22] : memref<1x128xf32, #tpu.memory_space<vmem>>, vector<1x128xf32>
    %29 = vector.broadcast %28 : vector<1x128xf32> to vector<128x128xf32>
    %30 = arith.addf %27, %29 : vector<128x128xf32>
    %31 = arith.negf %30 : vector<128x128xf32>
    %32 = math.exp %31 : vector<128x128xf32>
    %cst_23 = arith.constant 1.000000e+00 : f32
    %33 = vector.broadcast %cst_23 : f32 to vector<128x128xf32>
    %34 = arith.addf %33, %32 : vector<128x128xf32>
    %35 = arith.divf %33, %34 : vector<128x128xf32>
    %c0_24 = arith.constant 0 : index
    %c0_25 = arith.constant 0 : index
    %36 = vector.load %arg10[%c0_24, %c0_25] : memref<128x128xf32, #tpu.memory_space<vmem>>, vector<128x128xf32>
    tpu.vector_store %arg10[%c0_24, %c0_25], %35 {strides = array<i32>} : memref<128x128xf32, #tpu.memory_space<vmem>>, vector<128x128xf32>,
    return
  }
  func.func @transform_0(%arg0: i32) -> (i32, i32) {
    %c0_i32 = arith.constant 0 : i32
    %c0_i32_0 = arith.constant 0 : i32
    return %arg0, %c0_i32 : i32, i32
  }
  func.func @transform_1(%arg0: i32) -> (i32, i32) {
    %c0_i32 = arith.constant 0 : i32
    %c0_i32_0 = arith.constant 0 : i32
    %c0_i32_1 = arith.constant 0 : i32
    return %c0_i32, %c0_i32_0 : i32, i32
  }
  func.func @transform_2(%arg0: i32) -> (i32, i32) {
    %c0_i32 = arith.constant 0 : i32
    %c0_i32_0 = arith.constant 0 : i32
    %c0_i32_1 = arith.constant 0 : i32
    return %c0_i32, %c0_i32_0 : i32, i32
  }
  func.func @transform_3(%arg0: i32) -> (i32, i32) {
    %c0_i32 = arith.constant 0 : i32
    %c0_i32_0 = arith.constant 0 : i32
    %c0_i32_1 = arith.constant 0 : i32
    return %c0_i32, %c0_i32_0 : i32, i32
  }
  func.func @transform_4(%arg0: i32) -> (i32, i32) {
    %c0_i32 = arith.constant 0 : i32
    %c0_i32_0 = arith.constant 0 : i32
    %c0_i32_1 = arith.constant 0 : i32
    return %c0_i32, %c0_i32_0 : i32, i32
  }
  func.func @transform_5(%arg0: i32) -> (i32, i32) {
    %c0_i32 = arith.constant 0 : i32
    %c0_i32_0 = arith.constant 0 : i32
    %c0_i32_1 = arith.constant 0 : i32
    return %c0_i32, %c0_i32_0 : i32, i32
  }
  func.func @transform_6(%arg0: i32) -> (i32, i32) {
    %c0_i32 = arith.constant 0 : i32
    %c0_i32_0 = arith.constant 0 : i32
    %c0_i32_1 = arith.constant 0 : i32
    return %c0_i32, %c0_i32_0 : i32, i32
  }
  func.func @transform_7(%arg0: i32) -> (i32, i32) {
    %c0_i32 = arith.constant 0 : i32
    %c0_i32_0 = arith.constant 0 : i32
    %c0_i32_1 = arith.constant 0 : i32
    return %c0_i32, %c0_i32_0 : i32, i32
  }
  func.func @transform_8(%arg0: i32) -> (i32, i32) {
    %c0_i32 = arith.constant 0 : i32
    %c0_i32_0 = arith.constant 0 : i32
    %c0_i32_1 = arith.constant 0 : i32
    return %c0_i32, %c0_i32_0 : i32, i32
  }
  func.func @transform_9(%arg0: i32) -> (i32, i32) {
    %c0_i32 = arith.constant 0 : i32
    %c0_i32_0 = arith.constant 0 : i32
    return %arg0, %c0_i32 : i32, i32
  }
}

</mosaic_0001>

<llo_original>
// kernel: tpu_custom_call.1
$region0: #{tpu_custom_call.1}
  #allocation0 [shape = 'u32[]', space=smem, size = 0x4, offset = 0x4, fixed_abs, tag = 'smem constant byte address 0x4 - core index']
  #allocation1 [shape = 'u32[72,128]{1,0:T(1,128)}', space=vmem, size = 0x9000, scoped, tag = 'internal scratch']
  %s0 = inlined_call_operand.hbm [shape: f32[256,128], index: 0, kind: input, shape index: {}]
  %s1 = inlined_call_operand.hbm [shape: bf16[128,128], index: 1, kind: input, shape index: {}]
  %s2 = inlined_call_operand.vmem [shape: f32[1,128], index: 2, kind: input, shape index: {}]
  %s3 = inlined_call_operand.hbm [shape: bf16[128,128], index: 3, kind: input, shape index: {}]
  %s4 = inlined_call_operand.vmem [shape: f32[1,128], index: 4, kind: input, shape index: {}]
  %s5 = inlined_call_operand.hbm [shape: bf16[128,128], index: 5, kind: input, shape index: {}]
  %s6 = inlined_call_operand.vmem [shape: f32[1,128], index: 6, kind: input, shape index: {}]
  %s7 = inlined_call_operand.hbm [shape: bf16[128,128], index: 7, kind: input, shape index: {}]
  %s8 = inlined_call_operand.vmem [shape: f32[1,128], index: 8, kind: input, shape index: {}]
  %s9 = inlined_call_operand.hbm [shape: f32[256,128], index: 9, kind: output, shape index: {}]
  %s10 = sld [smem:[#allocation0]]
  $region89: #{tpu_custom_call.1} parent=0
    _
  %s12 = ssub.s32 1, %s10
  %s13 = scalar_select 0, %s12, %s10
  $region1: #{tpu_custom_call.1} parent=0
    #allocation2 [shape = 'u8[131072]{0}', space=vmem, size = 0x20000, scoped, tag = 'input window, operand 0']
    #allocation3 [shape = 's32[2]{0}', space=sflag, size = 0x8, scoped, tag = 'scoped memory for tpu_custom_call.1']
    #allocation4 [shape = 's32[2]{0}', space=sflag, size = 0x8, scoped, tag = 'scoped memory for tpu_custom_call.1']
    #allocation5 [shape = 'u8[32768]{0}', space=vmem, size = 0x8000, scoped, tag = 'input window, operand 1, single buffered']
    #allocation6 [shape = 's32[1]{0}', space=sflag, size = 0x4, scoped, tag = 'scoped memory for tpu_custom_call.1']
    #allocation7 [shape = 'u8[32768]{0}', space=vmem, size = 0x8000, scoped, tag = 'input window, operand 3, single buffered']
    #allocation8 [shape = 'u8[32768]{0}', space=vmem, size = 0x8000, scoped, tag = 'input window, operand 5, single buffered']
    #allocation9 [shape = 's32[1]{0}', space=sflag, size = 0x4, scoped, tag = 'scoped memory for tpu_custom_call.1']
    #allocation10 [shape = 'u8[32768]{0}', space=vmem, size = 0x8000, scoped, tag = 'input window, operand 7, single buffered']
    #allocation11 [shape = 'u8[131072]{0}', space=vmem, size = 0x20000, scoped, tag = 'output window, operand 0']
    %14 = vsyncpa [#allocation3], 0
    %s15 = scalar_lea.sflag [#allocation3], 1
    %16 = vsyncpa %s15, 0
    %17 = vsyncpa [#allocation6], 0
    %18 = vsyncpa [#allocation9], 0
    %19 = vsyncpa [#allocation4], 0
    %s20 = scalar_lea.sflag [#allocation4], 1
    %21 = vsyncpa %s20, 0
    loop: start=0, step=1, limit=4
    $region2: #{tpu_custom_call.1} parent=1 // loop_pre_header
      _
    $region3: #{tpu_custom_call.1} parent=1 // loop_header
      %s23 = sphi 0, %s27
      %p24 = scmp.ge.s32.totalorder %s23, 4
      %s33 = sphi 0, %s35
      %s36 = sphi 0, %s33
      %s37 = sphi 0, %s36
      %s53 = sphi 0, %s37
      %s57 = sphi 0, %s57
      %s59 = sphi 0, %s57
      %s60 = sphi 0, %s59
      %s74 = sphi 0, %s60
      %s78 = sphi 0, %s78
      %s80 = sphi 0, %s78
      %s81 = sphi 0, %s80
      %s95 = sphi 0, %s81
      %s99 = sphi 0, %s99
      %s101 = sphi 0, %s99
      %s102 = sphi 0, %s101
      %s116 = sphi 0, %s102
      %s120 = sphi 0, %s120
      %s122 = sphi 0, %s120
      %s123 = sphi 0, %s122
      %s137 = sphi 0, %s123
      %s141 = sphi 0, %s141
      %s143 = sphi 0, %s141
      %s144 = sphi 0, %s143
      %s158 = sphi 0, %s144
      %s162 = sphi 0, %s162
      %s164 = sphi 0, %s162
      %s165 = sphi 0, %s164
      %s179 = sphi 0, %s165
      %s183 = sphi 0, %s183
      %s185 = sphi 0, %s183
      %s186 = sphi 0, %s185
      %s200 = sphi 0, %s186
      %s204 = sphi 0, %s204
      %s206 = sphi 0, %s204
      %s207 = sphi 0, %s206
      %s221 = sphi 0, %s207
      %s227 = sphi 0, %s229
      %s230 = sphi 0, %s227
      %s231 = sphi 0, %s230
      %s247 = sphi 0, %s231
    $region4: #{tpu_custom_call.1} parent=1 // loop_header_branch
      %26 = sbr.rel (%p24) target = $region8
    $region5: #{tpu_custom_call.1} parent=1 // loop_body
      %s28 = ssub.s32 %s23, 1
      %s29 = ssub.s32 %s23, 2
      %s30 = sadd.s32 %s23, 1
      %s31 = ssub.s32 %s23, %s30
      %p32 = scmp.eq.s32.totalorder %s31, 0
      %s34 = sadd.s32 %s33, 1
      %s35 = scalar_select %p32, %s33, %s34
      %p38 = pneg %p32
      %p39 = scmp.eq.s32.totalorder %s23, 1
      %p40 = por %p38, %p39
      %p41 = scmp.ne.s32.totalorder %s33, %s36
      %p42 = scmp.eq.s32.totalorder %s23, 0
      %p43 = por %p41, %p42
      %p44 = scmp.ne.s32.totalorder %s33, %s36
      %p45 = scmp.eq.s32.totalorder %s28, 1
      %p46 = por %p44, %p45
      %p47 = scmp.ne.s32.totalorder %s36, %s37
      %p48 = scmp.eq.s32.totalorder %s28, 0
      %p49 = por %p47, %p48
      %p50 = scmp.ne.s32.totalorder %s36, %s37
      %p51 = scmp.eq.s32.totalorder %s29, 1
      %p52 = por %p50, %p51
      %p54 = scmp.ne.s32.totalorder %s37, %s53
      %p55 = scmp.eq.s32.totalorder %s29, 0
      %p56 = por %p54, %p55
      %s58 = sadd.s32 %s57, 1
      %p61 = scmp.eq.s32.totalorder %s23, 1
      %p62 = scmp.ne.s32.totalorder %s57, %s59
      %p63 = scmp.eq.s32.totalorder %s23, 0
      %p64 = por %p62, %p63
      %p65 = scmp.ne.s32.totalorder %s57, %s59
      %p66 = scmp.eq.s32.totalorder %s28, 1
      %p67 = por %p65, %p66
      %p68 = scmp.ne.s32.totalorder %s59, %s60
      %p69 = scmp.eq.s32.totalorder %s28, 0
      %p70 = por %p68, %p69
      %p71 = scmp.ne.s32.totalorder %s59, %s60
      %p72 = scmp.eq.s32.totalorder %s29, 1
      %p73 = por %p71, %p72
      %p75 = scmp.ne.s32.totalorder %s60, %s74
      %p76 = scmp.eq.s32.totalorder %s29, 0
      %p77 = por %p75, %p76
      %s79 = sadd.s32 %s78, 1
      %p82 = scmp.eq.s32.totalorder %s23, 1
      %p83 = scmp.ne.s32.totalorder %s78, %s80
      %p84 = scmp.eq.s32.totalorder %s23, 0
      %p85 = por %p83, %p84
      %p86 = scmp.ne.s32.totalorder %s78, %s80
      %p87 = scmp.eq.s32.totalorder %s28, 1
      %p88 = por %p86, %p87
      %p89 = scmp.ne.s32.totalorder %s80, %s81
      %p90 = scmp.eq.s32.totalorder %s28, 0
      %p91 = por %p89, %p90
      %p92 = scmp.ne.s32.totalorder %s80, %s81
      %p93 = scmp.eq.s32.totalorder %s29, 1
      %p94 = por %p92, %p93
      %p96 = scmp.ne.s32.totalorder %s81, %s95
      %p97 = scmp.eq.s32.totalorder %s29, 0
      %p98 = por %p96, %p97
      %s100 = sadd.s32 %s99, 1
      %p103 = scmp.eq.s32.totalorder %s23, 1
      %p104 = scmp.ne.s32.totalorder %s99, %s101
      %p105 = scmp.eq.s32.totalorder %s23, 0
      %p106 = por %p104, %p105
      %p107 = scmp.ne.s32.totalorder %s99, %s101
      %p108 = scmp.eq.s32.totalorder %s28, 1
      %p109 = por %p107, %p108
      %p110 = scmp.ne.s32.totalorder %s101, %s102
      %p111 = scmp.eq.s32.totalorder %s28, 0
      %p112 = por %p110, %p111
      %p113 = scmp.ne.s32.totalorder %s101, %s102
      %p114 = scmp.eq.s32.totalorder %s29, 1
      %p115 = por %p113, %p114
      %p117 = scmp.ne.s32.totalorder %s102, %s116
      %p118 = scmp.eq.s32.totalorder %s29, 0
      %p119 = por %p117, %p118
      %s121 = sadd.s32 %s120, 1
      %p124 = scmp.eq.s32.totalorder %s23, 1
      %p125 = scmp.ne.s32.totalorder %s120, %s122
      %p126 = scmp.eq.s32.totalorder %s23, 0
      %p127 = por %p125, %p126
      %p128 = scmp.ne.s32.totalorder %s120, %s122
      %p129 = scmp.eq.s32.totalorder %s28, 1
      %p130 = por %p128, %p129
      %p131 = scmp.ne.s32.totalorder %s122, %s123
      %p132 = scmp.eq.s32.totalorder %s28, 0
      %p133 = por %p131, %p132
      %p134 = scmp.ne.s32.totalorder %s122, %s123
      %p135 = scmp.eq.s32.totalorder %s29, 1
      %p136 = por %p134, %p135
      %p138 = scmp.ne.s32.totalorder %s123, %s137
      %p139 = scmp.eq.s32.totalorder %s29, 0
      %p140 = por %p138, %p139
      %s142 = sadd.s32 %s141, 1
      %p145 = scmp.eq.s32.totalorder %s23, 1
      %p146 = scmp.ne.s32.totalorder %s141, %s143
      %p147 = scmp.eq.s32.totalorder %s23, 0
      %p148 = por %p146, %p147
      %p149 = scmp.ne.s32.totalorder %s141, %s143
      %p150 = scmp.eq.s32.totalorder %s28, 1
      %p151 = por %p149, %p150
      %p152 = scmp.ne.s32.totalorder %s143, %s144
      %p153 = scmp.eq.s32.totalorder %s28, 0
      %p154 = por %p152, %p153
      %p155 = scmp.ne.s32.totalorder %s143, %s144
      %p156 = scmp.eq.s32.totalorder %s29, 1
      %p157 = por %p155, %p156
      %p159 = scmp.ne.s32.totalorder %s144, %s158
      %p160 = scmp.eq.s32.totalorder %s29, 0
      %p161 = por %p159, %p160
      %s163 = sadd.s32 %s162, 1
      %p166 = scmp.eq.s32.totalorder %s23, 1
      %p167 = scmp.ne.s32.totalorder %s162, %s164
      %p168 = scmp.eq.s32.totalorder %s23, 0
      %p169 = por %p167, %p168
      %p170 = scmp.ne.s32.totalorder %s162, %s164
      %p171 = scmp.eq.s32.totalorder %s28, 1
      %p172 = por %p170, %p171
      %p173 = scmp.ne.s32.totalorder %s164, %s165
      %p174 = scmp.eq.s32.totalorder %s28, 0
      %p175 = por %p173, %p174
      %p176 = scmp.ne.s32.totalorder %s164, %s165
      %p177 = scmp.eq.s32.totalorder %s29, 1
      %p178 = por %p176, %p177
      %p180 = scmp.ne.s32.totalorder %s165, %s179
      %p181 = scmp.eq.s32.totalorder %s29, 0
      %p182 = por %p180, %p181
      %s184 = sadd.s32 %s183, 1
      %p187 = scmp.eq.s32.totalorder %s23, 1
      %p188 = scmp.ne.s32.totalorder %s183, %s185
      %p189 = scmp.eq.s32.totalorder %s23, 0
      %p190 = por %p188, %p189
      %p191 = scmp.ne.s32.totalorder %s183, %s185
      %p192 = scmp.eq.s32.totalorder %s28, 1
      %p193 = por %p191, %p192
      %p194 = scmp.ne.s32.totalorder %s185, %s186
      %p195 = scmp.eq.s32.totalorder %s28, 0
      %p196 = por %p194, %p195
      %p197 = scmp.ne.s32.totalorder %s185, %s186
      %p198 = scmp.eq.s32.totalorder %s29, 1
      %p199 = por %p197, %p198
      %p201 = scmp.ne.s32.totalorder %s186, %s200
      %p202 = scmp.eq.s32.totalorder %s29, 0
      %p203 = por %p201, %p202
      %s205 = sadd.s32 %s204, 1
      %p208 = scmp.eq.s32.totalorder %s23, 1
      %p209 = scmp.ne.s32.totalorder %s204, %s206
      %p210 = scmp.eq.s32.totalorder %s23, 0
      %p211 = por %p209, %p210
      %p212 = scmp.ne.s32.totalorder %s204, %s206
      %p213 = scmp.eq.s32.totalorder %s28, 1
      %p214 = por %p212, %p213
      %p215 = scmp.ne.s32.totalorder %s206, %s207
      %p216 = scmp.eq.s32.totalorder %s28, 0
      %p217 = por %p215, %p216
      %p218 = scmp.ne.s32.totalorder %s206, %s207
      %p219 = scmp.eq.s32.totalorder %s29, 1
      %p220 = por %p218, %p219
      %p222 = scmp.ne.s32.totalorder %s207, %s221
      %p223 = scmp.eq.s32.totalorder %s29, 0
      %p224 = por %p222, %p223
      %s225 = ssub.s32 %s23, %s30
      %p226 = scmp.eq.s32.totalorder %s225, 0
      %s228 = sadd.s32 %s227, 1
      %s229 = scalar_select %p226, %s227, %s228
      %p232 = pneg %p226
      %p233 = scmp.eq.s32.totalorder %s23, 1
      %p234 = por %p232, %p233
      %p235 = scmp.ne.s32.totalorder %s227, %s230
      %p236 = scmp.eq.s32.totalorder %s23, 0
      %p237 = por %p235, %p236
      %p238 = scmp.ne.s32.totalorder %s227, %s230
      %p239 = scmp.eq.s32.totalorder %s28, 1
      %p240 = por %p238, %p239
      %p241 = scmp.ne.s32.totalorder %s230, %s231
      %p242 = scmp.eq.s32.totalorder %s28, 0
      %p243 = por %p241, %p242
      %p244 = scmp.ne.s32.totalorder %s230, %s231
      %p245 = scmp.eq.s32.totalorder %s29, 1
      %p246 = por %p244, %p245
      %p248 = scmp.ne.s32.totalorder %s231, %s247
      %p249 = scmp.eq.s32.totalorder %s29, 0
      %p250 = por %p248, %p249
      %p251 = scmp.le.s32.totalorder 1, %s23
      %p252 = scmp.lt.s32.totalorder %s23, 3
      %p253 = pnand %p251, %p252
      %p254 = pneg %p253
      // Predicated region
      $region9: #{tpu_custom_call.1} parent=5 // pred_check
        _
      $region10: #{tpu_custom_call.1} parent=5 // pred_check_branch
        %256 = sbr.rel (%p253) target = $region12
      $region11: #{tpu_custom_call.1} parent=5 // pred_region
        %s257 = ssub.s32 %s23, 1
        // Predicated region
        $region13: #{tpu_custom_call.1} parent=11 // pred_check
          %p258 = pneg %p70
        $region14: #{tpu_custom_call.1} parent=11 // pred_check_branch
          %260 = sbr.rel (%p258) target = $region16
        $region15: #{tpu_custom_call.1} parent=11 // pred_region
          %262 = vsyncadd [#allocation6], 0
          %s263 = sshll.u32 %s1, 4
          %s264 = int_to_ptr.hbm [resolvable:$true] %s263
          %s265 = sshll.u32 [#allocation5], 4
          %s266 = int_to_ptr.vmem [resolvable:$true] %s265
          %271 = dma.hbm_to_vmem [thread:$0]  %s264, 1024, %s266, [#allocation6], 64, 64, 4
        $region16: #{tpu_custom_call.1} parent=11 // pred_fallthru
          _
        // Predicated region
        $region17: #{tpu_custom_call.1} parent=11 // pred_check
          %p272 = pneg %p91
        $region18: #{tpu_custom_call.1} parent=11 // pred_check_branch
          %274 = sbr.rel (%p272) target = $region20
        $region19: #{tpu_custom_call.1} parent=11 // pred_region
          _
        $region20: #{tpu_custom_call.1} parent=11 // pred_fallthru
          _
        // Predicated region
        $region21: #{tpu_custom_call.1} parent=11 // pred_check
          %p275 = pneg %p112
        $region22: #{tpu_custom_call.1} parent=11 // pred_check_branch
          %277 = sbr.rel (%p275) target = $region24
        $region23: #{tpu_custom_call.1} parent=11 // pred_region
          %279 = vsyncadd [#allocation6], 0
          %s280 = sshll.u32 %s3, 4
          %s281 = int_to_ptr.hbm [resolvable:$true] %s280
          %s282 = sshll.u32 [#allocation7], 4
          %s283 = int_to_ptr.vmem [resolvable:$true] %s282
          %288 = dma.hbm_to_vmem [thread:$0]  %s281, 1024, %s283, [#allocation6], 64, 64, 4
        $region24: #{tpu_custom_call.1} parent=11 // pred_fallthru
          _
        // Predicated region
        $region25: #{tpu_custom_call.1} parent=11 // pred_check
          %p289 = pneg %p133
        $region26: #{tpu_custom_call.1} parent=11 // pred_check_branch
          %291 = sbr.rel (%p289) target = $region28
        $region27: #{tpu_custom_call.1} parent=11 // pred_region
          _
        $region28: #{tpu_custom_call.1} parent=11 // pred_fallthru
          _
        // Predicated region
        $region29: #{tpu_custom_call.1} parent=11 // pred_check
          %p292 = pneg %p154
        $region30: #{tpu_custom_call.1} parent=11 // pred_check_branch
          %294 = sbr.rel (%p292) target = $region32
        $region31: #{tpu_custom_call.1} parent=11 // pred_region
          %296 = vsyncadd [#allocation9], 0
          %s297 = sshll.u32 %s5, 4
          %s298 = int_to_ptr.hbm [resolvable:$true] %s297
          %s299 = sshll.u32 [#allocation8], 4
          %s300 = int_to_ptr.vmem [resolvable:$true] %s299
          %305 = dma.hbm_to_vmem [thread:$0]  %s298, 1024, %s300, [#allocation9], 64, 64, 4
        $region32: #{tpu_custom_call.1} parent=11 // pred_fallthru
          _
        // Predicated region
        $region33: #{tpu_custom_call.1} parent=11 // pred_check
          %p306 = pneg %p175
        $region34: #{tpu_custom_call.1} parent=11 // pred_check_branch
          %308 = sbr.rel (%p306) target = $region36
        $region35: #{tpu_custom_call.1} parent=11 // pred_region
          _
        $region36: #{tpu_custom_call.1} parent=11 // pred_fallthru
          _
        // Predicated region
        $region37: #{tpu_custom_call.1} parent=11 // pred_check
          %p309 = pneg %p196
        $region38: #{tpu_custom_call.1} parent=11 // pred_check_branch
          %311 = sbr.rel (%p309) target = $region40
        $region39: #{tpu_custom_call.1} parent=11 // pred_region
          %313 = vsyncadd [#allocation9], 0
          %s314 = sshll.u32 %s7, 4
          %s315 = int_to_ptr.hbm [resolvable:$true] %s314
          %s316 = sshll.u32 [#allocation10], 4
          %s317 = int_to_ptr.vmem [resolvable:$true] %s316
          %322 = dma.hbm_to_vmem [thread:$0]  %s315, 1024, %s317, [#allocation9], 64, 64, 4
        $region40: #{tpu_custom_call.1} parent=11 // pred_fallthru
          _
        // Predicated region
        $region41: #{tpu_custom_call.1} parent=11 // pred_check
          %p323 = pneg %p217
        $region42: #{tpu_custom_call.1} parent=11 // pred_check_branch
          %325 = sbr.rel (%p323) target = $region44
        $region43: #{tpu_custom_call.1} parent=11 // pred_region
          _
        $region44: #{tpu_custom_call.1} parent=11 // pred_fallthru
          _
      $region12: #{tpu_custom_call.1} parent=5 // pred_fallthru
        _
      %p326 = scmp.lt.s32.totalorder %s23, 2
      // Predicated region
      $region45: #{tpu_custom_call.1} parent=5 // pred_check
        %p327 = pneg %p326
      $region46: #{tpu_custom_call.1} parent=5 // pred_check_branch
        %329 = sbr.rel (%p327) target = $region48
      $region47: #{tpu_custom_call.1} parent=5 // pred_region
        // Predicated region
        $region49: #{tpu_custom_call.1} parent=47 // pred_check
          %p330 = pneg %p43
        $region50: #{tpu_custom_call.1} parent=47 // pred_check_branch
          %332 = sbr.rel (%p330) target = $region52
        $region51: #{tpu_custom_call.1} parent=47 // pred_region
          %s333 = sand.u32 %s33, 1
          %s334 = scalar_lea.sflag [#allocation3], %s333
          %s335 = sand.u32 %s33, 1
          %s336 = smul.addr %s335, 128
          %s337 = scalar_lea.vmem [#allocation2], %s336
          %s338 = smul.u32 16, %s23
          %340 = vsyncadd %s334, 0
          %s341 = smul.addr %s338, 8
          %s342 = scalar_lea.hbm %s0, %s341
          %s343 = sshll.u32 %s342, 4
          %s344 = int_to_ptr.hbm [resolvable:$true] %s343
          %s345 = sshll.u32 %s337, 4
          %s346 = int_to_ptr.vmem [resolvable:$true] %s345
          %351 = dma.hbm_to_vmem [thread:$0]  %s344, 2048, %s346, %s334, 128, 128, 8
        $region52: #{tpu_custom_call.1} parent=47 // pred_fallthru
          _
      $region48: #{tpu_custom_call.1} parent=5 // pred_fallthru
        _
      %p352 = scmp.le.s32.totalorder 1, %s23
      %p353 = scmp.lt.s32.totalorder %s23, 3
      %p354 = pnand %p352, %p353
      %p355 = pneg %p354
      // Predicated region
      $region53: #{tpu_custom_call.1} parent=5 // pred_check
        _
      $region54: #{tpu_custom_call.1} parent=5 // pred_check_branch
        %357 = sbr.rel (%p354) target = $region56
      $region55: #{tpu_custom_call.1} parent=5 // pred_region
        %s358 = ssub.s32 %s23, 1
        %s359 = sand.u32 %s36, 1
        %s360 = scalar_lea.sflag [#allocation3], %s359
        %s361 = sand.u32 %s36, 1
        %s362 = smul.addr %s361, 128
        %s363 = scalar_lea.vmem [#allocation2], %s362
        // Predicated region
        $region57: #{tpu_custom_call.1} parent=55 // pred_check
          %p364 = pneg %p49
        $region58: #{tpu_custom_call.1} parent=55 // pred_check_branch
          %366 = sbr.rel (%p364) target = $region60
        $region59: #{tpu_custom_call.1} parent=55 // pred_region
          %368 = dma.done %s360, 2048
        $region60: #{tpu_custom_call.1} parent=55 // pred_fallthru
          _
        // Predicated region
        $region61: #{tpu_custom_call.1} parent=55 // pred_check
          %p369 = pneg %p70
        $region62: #{tpu_custom_call.1} parent=55 // pred_check_branch
          %371 = sbr.rel (%p369) target = $region64
        $region63: #{tpu_custom_call.1} parent=55 // pred_region
          %373 = dma.done [#allocation6], 1024
        $region64: #{tpu_custom_call.1} parent=55 // pred_fallthru
          _
        // Predicated region
        $region65: #{tpu_custom_call.1} parent=55 // pred_check
          %p374 = pneg %p112
        $region66: #{tpu_custom_call.1} parent=55 // pred_check_branch
          %376 = sbr.rel (%p374) target = $region68
        $region67: #{tpu_custom_call.1} parent=55 // pred_region
          %378 = dma.done [#allocation6], 1024
        $region68: #{tpu_custom_call.1} parent=55 // pred_fallthru
          _
        // Predicated region
        $region69: #{tpu_custom_call.1} parent=55 // pred_check
          %p379 = pneg %p154
        $region70: #{tpu_custom_call.1} parent=55 // pred_check_branch
          %381 = sbr.rel (%p379) target = $region72
        $region71: #{tpu_custom_call.1} parent=55 // pred_region
          %383 = dma.done [#allocation9], 1024
        $region72: #{tpu_custom_call.1} parent=55 // pred_fallthru
          _
        // Predicated region
        $region73: #{tpu_custom_call.1} parent=55 // pred_check
          %p384 = pneg %p196
        $region74: #{tpu_custom_call.1} parent=55 // pred_check_branch
          %386 = sbr.rel (%p384) target = $region76
        $region75: #{tpu_custom_call.1} parent=55 // pred_region
          %388 = dma.done [#allocation9], 1024
        $region76: #{tpu_custom_call.1} parent=55 // pred_fallthru
          _
        %s389 = sand.u32 %s36, 1
        %s390 = scalar_lea.sflag [#allocation3], %s389
        %s391 = sand.u32 %s36, 1
        %s392 = smul.addr %s391, 128
        %s393 = scalar_lea.vmem [#allocation2], %s392
        %p394 = pneg %p49
        %p395 = pneg %p46
        %p396 = pneg %p70
        %p397 = pneg %p67
        %p398 = pneg %p91
        %p399 = pneg %p88
        %p400 = pneg %p112
        %p401 = pneg %p109
        %p402 = pneg %p133
        %p403 = pneg %p130
        %p404 = pneg %p154
        %p405 = pneg %p151
        %p406 = pneg %p175
        %p407 = pneg %p172
        %p408 = pneg %p196
        %p409 = pneg %p193
        %p410 = pneg %p217
        %p411 = pneg %p214
        %p412 = pneg %p243
        %p413 = pneg %p240
        %s414 = sand.u32 %s230, 1
        %s415 = scalar_lea.sflag [#allocation4], %s414
        %s416 = sand.u32 %s230, 1
        %s417 = smul.addr %s416, 128
        %s418 = scalar_lea.vmem [#allocation11], %s417
        %s419 = smul.u32 16, %s28
        %s420 = smul.u32 16, %s28
        %v421 = vld [vmem:[%s363] sm:$0xff]
        %v422 = vld [vmem:[%s363 + $0x8] sm:$0xff]
        %v423 = vld [vmem:[%s363 + $0x10] sm:$0xff]
        %v424 = vld [vmem:[%s363 + $0x18] sm:$0xff]
        %v425 = vld [vmem:[%s363 + $0x20] sm:$0xff]
        %v426 = vld [vmem:[%s363 + $0x28] sm:$0xff]
        %v427 = vld [vmem:[%s363 + $0x30] sm:$0xff]
        %v428 = vld [vmem:[%s363 + $0x38] sm:$0xff]
        %v429 = vld [vmem:[%s363 + $0x40] sm:$0xff]
        %v430 = vld [vmem:[%s363 + $0x48] sm:$0xff]
        %v431 = vld [vmem:[%s363 + $0x50] sm:$0xff]
        %v432 = vld [vmem:[%s363 + $0x58] sm:$0xff]
        %v433 = vld [vmem:[%s363 + $0x60] sm:$0xff]
        %v434 = vld [vmem:[%s363 + $0x68] sm:$0xff]
        %v435 = vld [vmem:[%s363 + $0x70] sm:$0xff]
        %v436 = vld [vmem:[%s363 + $0x78] sm:$0xff]
        %v437 = vpack.c.bf16 %v422, %v421
        %v438 = vpack.c.bf16 %v424, %v423
        %v439 = vpack.c.bf16 %v426, %v425
        %v440 = vpack.c.bf16 %v428, %v427
        %v441 = vpack.c.bf16 %v430, %v429
        %v442 = vpack.c.bf16 %v432, %v431
        %v443 = vpack.c.bf16 %v434, %v433
        %v444 = vpack.c.bf16 %v436, %v435
        %v445 = vld [vmem:[#allocation5] sm:$0xf]
        %v446 = vld [vmem:[#allocation5 + $0x4] sm:$0xf]
        %v447 = vld [vmem:[#allocation5 + $0x8] sm:$0xf]
        %v448 = vld [vmem:[#allocation5 + $0xc] sm:$0xf]
        %v449 = vld [vmem:[#allocation5 + $0x10] sm:$0xf]
        %v450 = vld [vmem:[#allocation5 + $0x14] sm:$0xf]
        %v451 = vld [vmem:[#allocation5 + $0x18] sm:$0xf]
        %v452 = vld [vmem:[#allocation5 + $0x1c] sm:$0xf]
        %v453 = vld [vmem:[#allocation5 + $0x20] sm:$0xf]
        %v454 = vld [vmem:[#allocation5 + $0x24] sm:$0xf]
        %v455 = vld [vmem:[#allocation5 + $0x28] sm:$0xf]
        %v456 = vld [vmem:[#allocation5 + $0x2c] sm:$0xf]
        %v457 = vld [vmem:[#allocation5 + $0x30] sm:$0xf]
        %v458 = vld [vmem:[#allocation5 + $0x34] sm:$0xf]
        %v459 = vld [vmem:[#allocation5 + $0x38] sm:$0xf]
        %v460 = vld [vmem:[#allocation5 + $0x3c] sm:$0xf]
        %v461 = vld [vmem:[%s2] sm:$0x1]
        %v463 = vperm.slane %v461, 0
        %v481 = vunpack.c.l.b16 %v445
        %v482 = vunpack.c.l.b16 %v446
        %v483 = vunpack.c.l.b16 %v447
        %v484 = vunpack.c.l.b16 %v448
        %v485 = vunpack.c.l.b16 %v449
        %v486 = vunpack.c.l.b16 %v450
        %v487 = vunpack.c.l.b16 %v451
        %v488 = vunpack.c.l.b16 %v452
        %v489 = vunpack.c.l.b16 %v453
        %v490 = vunpack.c.l.b16 %v454
        %v491 = vunpack.c.l.b16 %v455
        %v492 = vunpack.c.l.b16 %v456
        %v493 = vunpack.c.l.b16 %v457
        %v494 = vunpack.c.l.b16 %v458
        %v495 = vunpack.c.l.b16 %v459
        %v496 = vunpack.c.l.b16 %v460
        %v497 = vpack.c.b16 %v482, %v481
        %v498 = vpack.c.b16 %v484, %v483
        %v499 = vpack.c.b16 %v486, %v485
        %v500 = vpack.c.b16 %v488, %v487
        %v501 = vpack.c.b16 %v490, %v489
        %v502 = vpack.c.b16 %v492, %v491
        %v503 = vpack.c.b16 %v494, %v493
        %v504 = vpack.c.b16 %v496, %v495
        %513 = vmatpush.bf16.msra.mxu0 %v504
        %514 = vmatpush.bf16.msra.mxu0 %v503
        %515 = vmatpush.bf16.msra.mxu0 %v502
        %516 = vmatpush.bf16.msra.mxu0 %v501
        %517 = vmatpush.bf16.msra.mxu0 %v500
        %518 = vmatpush.bf16.msra.mxu0 %v499
        %519 = vmatpush.bf16.msra.mxu0 %v498
        %520 = vmatpush.bf16.msra.mxu0 %v497
        %521 = vmatmul.bf16.gmra.mxu0 %v437
        %v522 = vpop.f32.mrf.mxu0
        %v523 = vadd.f32 %v463, %v522
        %v524 = vpop.f32.mrf.mxu0
        %v525 = vadd.f32 %v463, %v524
        %526 = vmatmul.bf16.gmra.mxu0 %v438
        %v527 = vpop.f32.mrf.mxu0
        %v528 = vadd.f32 %v463, %v527
        %v529 = vpop.f32.mrf.mxu0
        %v530 = vadd.f32 %v463, %v529
        %531 = vmatmul.bf16.gmra.mxu0 %v439
        %v532 = vpop.f32.mrf.mxu0
        %v533 = vadd.f32 %v463, %v532
        %v534 = vpop.f32.mrf.mxu0
        %v535 = vadd.f32 %v463, %v534
        %536 = vmatmul.bf16.gmra.mxu0 %v440
        %v537 = vpop.f32.mrf.mxu0
        %v538 = vadd.f32 %v463, %v537
        %v539 = vpop.f32.mrf.mxu0
        %v540 = vadd.f32 %v463, %v539
        %541 = vmatmul.bf16.gmra.mxu0 %v441
        %v542 = vpop.f32.mrf.mxu0
        %v543 = vadd.f32 %v463, %v542
        %v544 = vpop.f32.mrf.mxu0
        %v545 = vadd.f32 %v463, %v544
        %546 = vmatmul.bf16.gmra.mxu0 %v442
        %v547 = vpop.f32.mrf.mxu0
        %v548 = vadd.f32 %v463, %v547
        %v549 = vpop.f32.mrf.mxu0
        %v550 = vadd.f32 %v463, %v549
        %551 = vmatmul.bf16.gmra.mxu0 %v443
        %v552 = vpop.f32.mrf.mxu0
        %v553 = vadd.f32 %v463, %v552
        %v554 = vpop.f32.mrf.mxu0
        %v555 = vadd.f32 %v463, %v554
        %556 = vmatmul.bf16.gmra.mxu0 %v444
        %v557 = vpop.f32.mrf.mxu0
        %v558 = vadd.f32 %v463, %v557
        %v559 = vpop.f32.mrf.mxu0
        %v560 = vadd.f32 %v463, %v559
        %561 = vdwg.mxu0
        %v562 = vmax.f32 %v523, 0.0
        %v563 = vmax.f32 %v525, 0.0
        %v564 = vmax.f32 %v528, 0.0
        %v565 = vmax.f32 %v530, 0.0
        %v566 = vmax.f32 %v533, 0.0
        %v567 = vmax.f32 %v535, 0.0
        %v568 = vmax.f32 %v538, 0.0
        %v569 = vmax.f32 %v540, 0.0
        %v570 = vmax.f32 %v543, 0.0
        %v571 = vmax.f32 %v545, 0.0
        %v572 = vmax.f32 %v548, 0.0
        %v573 = vmax.f32 %v550, 0.0
        %v574 = vmax.f32 %v553, 0.0
        %v575 = vmax.f32 %v555, 0.0
        %v576 = vmax.f32 %v558, 0.0
        %v577 = vmax.f32 %v560, 0.0
        %v578 = vpack.c.bf16 %v563, %v562
        %v579 = vpack.c.bf16 %v565, %v564
        %v580 = vpack.c.bf16 %v567, %v566
        %v581 = vpack.c.bf16 %v569, %v568
        %v582 = vpack.c.bf16 %v571, %v570
        %v583 = vpack.c.bf16 %v573, %v572
        %v584 = vpack.c.bf16 %v575, %v574
        %v585 = vpack.c.bf16 %v577, %v576
        %v586 = vld [vmem:[#allocation7] sm:$0xf]
        %v587 = vld [vmem:[#allocation7 + $0x4] sm:$0xf]
        %v588 = vld [vmem:[#allocation7 + $0x8] sm:$0xf]
        %v589 = vld [vmem:[#allocation7 + $0xc] sm:$0xf]
        %v590 = vld [vmem:[#allocation7 + $0x10] sm:$0xf]
        %v591 = vld [vmem:[#allocation7 + $0x14] sm:$0xf]
        %v592 = vld [vmem:[#allocation7 + $0x18] sm:$0xf]
        %v593 = vld [vmem:[#allocation7 + $0x1c] sm:$0xf]
        %v594 = vld [vmem:[#allocation7 + $0x20] sm:$0xf]
        %v595 = vld [vmem:[#allocation7 + $0x24] sm:$0xf]
        %v596 = vld [vmem:[#allocation7 + $0x28] sm:$0xf]
        %v597 = vld [vmem:[#allocation7 + $0x2c] sm:$0xf]
        %v598 = vld [vmem:[#allocation7 + $0x30] sm:$0xf]
        %v599 = vld [vmem:[#allocation7 + $0x34] sm:$0xf]
        %v600 = vld [vmem:[#allocation7 + $0x38] sm:$0xf]
        %v601 = vld [vmem:[#allocation7 + $0x3c] sm:$0xf]
        %v602 = vld [vmem:[%s4] sm:$0x1]
        %v604 = vperm.slane %v602, 0
        %v622 = vunpack.c.l.b16 %v586
        %v623 = vunpack.c.l.b16 %v587
        %v624 = vunpack.c.l.b16 %v588
        %v625 = vunpack.c.l.b16 %v589
        %v626 = vunpack.c.l.b16 %v590
        %v627 = vunpack.c.l.b16 %v591
        %v628 = vunpack.c.l.b16 %v592
        %v629 = vunpack.c.l.b16 %v593
        %v630 = vunpack.c.l.b16 %v594
        %v631 = vunpack.c.l.b16 %v595
        %v632 = vunpack.c.l.b16 %v596
        %v633 = vunpack.c.l.b16 %v597
        %v634 = vunpack.c.l.b16 %v598
        %v635 = vunpack.c.l.b16 %v599
        %v636 = vunpack.c.l.b16 %v600
        %v637 = vunpack.c.l.b16 %v601
        %v638 = vpack.c.b16 %v623, %v622
        %v639 = vpack.c.b16 %v625, %v624
        %v640 = vpack.c.b16 %v627, %v626
        %v641 = vpack.c.b16 %v629, %v628
        %v642 = vpack.c.b16 %v631, %v630
        %v643 = vpack.c.b16 %v633, %v632
        %v644 = vpack.c.b16 %v635, %v634
        %v645 = vpack.c.b16 %v637, %v636
        %654 = vmatpush.bf16.msra.mxu0 %v645
        %655 = vmatpush.bf16.msra.mxu0 %v644
        %656 = vmatpush.bf16.msra.mxu0 %v643
        %657 = vmatpush.bf16.msra.mxu0 %v642
        %658 = vmatpush.bf16.msra.mxu0 %v641
        %659 = vmatpush.bf16.msra.mxu0 %v640
        %660 = vmatpush.bf16.msra.mxu0 %v639
        %661 = vmatpush.bf16.msra.mxu0 %v638
        %662 = vmatmul.bf16.gmra.mxu0 %v578
        %v663 = vpop.f32.mrf.mxu0
        %v664 = vadd.f32 %v604, %v663
        %v665 = vpop.f32.mrf.mxu0
        %v666 = vadd.f32 %v604, %v665
        %667 = vmatmul.bf16.gmra.mxu0 %v579
        %v668 = vpop.f32.mrf.mxu0
        %v669 = vadd.f32 %v604, %v668
        %v670 = vpop.f32.mrf.mxu0
        %v671 = vadd.f32 %v604, %v670
        %672 = vmatmul.bf16.gmra.mxu0 %v580
        %v673 = vpop.f32.mrf.mxu0
        %v674 = vadd.f32 %v604, %v673
        %v675 = vpop.f32.mrf.mxu0
        %v676 = vadd.f32 %v604, %v675
        %677 = vmatmul.bf16.gmra.mxu0 %v581
        %v678 = vpop.f32.mrf.mxu0
        %v679 = vadd.f32 %v604, %v678
        %v680 = vpop.f32.mrf.mxu0
        %v681 = vadd.f32 %v604, %v680
        %682 = vmatmul.bf16.gmra.mxu0 %v582
        %v683 = vpop.f32.mrf.mxu0
        %v684 = vadd.f32 %v604, %v683
        %v685 = vpop.f32.mrf.mxu0
        %v686 = vadd.f32 %v604, %v685
        %687 = vmatmul.bf16.gmra.mxu0 %v583
        %v688 = vpop.f32.mrf.mxu0
        %v689 = vadd.f32 %v604, %v688
        %v690 = vpop.f32.mrf.mxu0
        %v691 = vadd.f32 %v604, %v690
        %692 = vmatmul.bf16.gmra.mxu0 %v584
        %v693 = vpop.f32.mrf.mxu0
        %v694 = vadd.f32 %v604, %v693
        %v695 = vpop.f32.mrf.mxu0
        %v696 = vadd.f32 %v604, %v695
        %697 = vmatmul.bf16.gmra.mxu0 %v585
        %v698 = vpop.f32.mrf.mxu0
        %v699 = vadd.f32 %v604, %v698
        %v700 = vpop.f32.mrf.mxu0
        %v701 = vadd.f32 %v604, %v700
        %702 = vdwg.mxu0
        %v703 = vmax.f32 %v664, 0.0
        %v704 = vmax.f32 %v666, 0.0
        %v705 = vmax.f32 %v669, 0.0
        %v706 = vmax.f32 %v671, 0.0
        %v707 = vmax.f32 %v674, 0.0
        %v708 = vmax.f32 %v676, 0.0
        %v709 = vmax.f32 %v679, 0.0
        %v710 = vmax.f32 %v681, 0.0
        %v711 = vmax.f32 %v684, 0.0
        %v712 = vmax.f32 %v686, 0.0
        %v713 = vmax.f32 %v689, 0.0
        %v714 = vmax.f32 %v691, 0.0
        %v715 = vmax.f32 %v694, 0.0
        %v716 = vmax.f32 %v696, 0.0
        %v717 = vmax.f32 %v699, 0.0
        %v718 = vmax.f32 %v701, 0.0
        %v719 = vpack.c.bf16 %v704, %v703
        %v720 = vpack.c.bf16 %v706, %v705
        %v721 = vpack.c.bf16 %v708, %v707
        %v722 = vpack.c.bf16 %v710, %v709
        %v723 = vpack.c.bf16 %v712, %v711
        %v724 = vpack.c.bf16 %v714, %v713
        %v725 = vpack.c.bf16 %v716, %v715
        %v726 = vpack.c.bf16 %v718, %v717
        %v727 = vld [vmem:[#allocation8] sm:$0xf]
        %v728 = vld [vmem:[#allocation8 + $0x4] sm:$0xf]
        %v729 = vld [vmem:[#allocation8 + $0x8] sm:$0xf]
        %v730 = vld [vmem:[#allocation8 + $0xc] sm:$0xf]
        %v731 = vld [vmem:[#allocation8 + $0x10] sm:$0xf]
        %v732 = vld [vmem:[#allocation8 + $0x14] sm:$0xf]
        %v733 = vld [vmem:[#allocation8 + $0x18] sm:$0xf]
        %v734 = vld [vmem:[#allocation8 + $0x1c] sm:$0xf]
        %v735 = vld [vmem:[#allocation8 + $0x20] sm:$0xf]
        %v736 = vld [vmem:[#allocation8 + $0x24] sm:$0xf]
        %v737 = vld [vmem:[#allocation8 + $0x28] sm:$0xf]
        %v738 = vld [vmem:[#allocation8 + $0x2c] sm:$0xf]
        %v739 = vld [vmem:[#allocation8 + $0x30] sm:$0xf]
        %v740 = vld [vmem:[#allocation8 + $0x34] sm:$0xf]
        %v741 = vld [vmem:[#allocation8 + $0x38] sm:$0xf]
        %v742 = vld [vmem:[#allocation8 + $0x3c] sm:$0xf]
        %v743 = vld [vmem:[%s6] sm:$0x1]
        %v745 = vperm.slane %v743, 0
        %v763 = vunpack.c.l.b16 %v727
        %v764 = vunpack.c.l.b16 %v728
        %v765 = vunpack.c.l.b16 %v729
        %v766 = vunpack.c.l.b16 %v730
        %v767 = vunpack.c.l.b16 %v731
        %v768 = vunpack.c.l.b16 %v732
        %v769 = vunpack.c.l.b16 %v733
        %v770 = vunpack.c.l.b16 %v734
        %v771 = vunpack.c.l.b16 %v735
        %v772 = vunpack.c.l.b16 %v736
        %v773 = vunpack.c.l.b16 %v737
        %v774 = vunpack.c.l.b16 %v738
        %v775 = vunpack.c.l.b16 %v739
        %v776 = vunpack.c.l.b16 %v740
        %v777 = vunpack.c.l.b16 %v741
        %v778 = vunpack.c.l.b16 %v742
        %v779 = vpack.c.b16 %v764, %v763
        %v780 = vpack.c.b16 %v766, %v765
        %v781 = vpack.c.b16 %v768, %v767
        %v782 = vpack.c.b16 %v770, %v769
        %v783 = vpack.c.b16 %v772, %v771
        %v784 = vpack.c.b16 %v774, %v773
        %v785 = vpack.c.b16 %v776, %v775
        %v786 = vpack.c.b16 %v778, %v777
        %795 = vmatpush.bf16.msra.mxu0 %v786
        %796 = vmatpush.bf16.msra.mxu0 %v785
        %797 = vmatpush.bf16.msra.mxu0 %v784
        %798 = vmatpush.bf16.msra.mxu0 %v783
        %799 = vmatpush.bf16.msra.mxu0 %v782
        %800 = vmatpush.bf16.msra.mxu0 %v781
        %801 = vmatpush.bf16.msra.mxu0 %v780
        %802 = vmatpush.bf16.msra.mxu0 %v779
        %803 = vmatmul.bf16.gmra.mxu0 %v719
        %v804 = vpop.f32.mrf.mxu0
        %v805 = vadd.f32 %v745, %v804
        %v806 = vpop.f32.mrf.mxu0
        %v807 = vadd.f32 %v745, %v806
        %808 = vmatmul.bf16.gmra.mxu0 %v720
        %v809 = vpop.f32.mrf.mxu0
        %v810 = vadd.f32 %v745, %v809
        %v811 = vpop.f32.mrf.mxu0
        %v812 = vadd.f32 %v745, %v811
        %813 = vmatmul.bf16.gmra.mxu0 %v721
        %v814 = vpop.f32.mrf.mxu0
        %v815 = vadd.f32 %v745, %v814
        %v816 = vpop.f32.mrf.mxu0
        %v817 = vadd.f32 %v745, %v816
        %818 = vmatmul.bf16.gmra.mxu0 %v722
        %v819 = vpop.f32.mrf.mxu0
        %v820 = vadd.f32 %v745, %v819
        %v821 = vpop.f32.mrf.mxu0
        %v822 = vadd.f32 %v745, %v821
        %823 = vmatmul.bf16.gmra.mxu0 %v723
        %v824 = vpop.f32.mrf.mxu0
        %v825 = vadd.f32 %v745, %v824
        %v826 = vpop.f32.mrf.mxu0
        %v827 = vadd.f32 %v745, %v826
        %828 = vmatmul.bf16.gmra.mxu0 %v724
        %v829 = vpop.f32.mrf.mxu0
        %v830 = vadd.f32 %v745, %v829
        %v831 = vpop.f32.mrf.mxu0
        %v832 = vadd.f32 %v745, %v831
        %833 = vmatmul.bf16.gmra.mxu0 %v725
        %v834 = vpop.f32.mrf.mxu0
        %v835 = vadd.f32 %v745, %v834
        %v836 = vpop.f32.mrf.mxu0
        %v837 = vadd.f32 %v745, %v836
        %838 = vmatmul.bf16.gmra.mxu0 %v726
        %v839 = vpop.f32.mrf.mxu0
        %v840 = vadd.f32 %v745, %v839
        %v841 = vpop.f32.mrf.mxu0
        %v842 = vadd.f32 %v745, %v841
        %843 = vdwg.mxu0
        %v844 = vmax.f32 %v805, 0.0
        %v845 = vmax.f32 %v807, 0.0
        %v846 = vmax.f32 %v810, 0.0
        %v847 = vmax.f32 %v812, 0.0
        %v848 = vmax.f32 %v815, 0.0
        %v849 = vmax.f32 %v817, 0.0
        %v850 = vmax.f32 %v820, 0.0
        %v851 = vmax.f32 %v822, 0.0
        %v852 = vmax.f32 %v825, 0.0
        %v853 = vmax.f32 %v827, 0.0
        %v854 = vmax.f32 %v830, 0.0
        %v855 = vmax.f32 %v832, 0.0
        %v856 = vmax.f32 %v835, 0.0
        %v857 = vmax.f32 %v837, 0.0
        %v858 = vmax.f32 %v840, 0.0
        %v859 = vmax.f32 %v842, 0.0
        %v860 = vpack.c.bf16 %v845, %v844
        %v861 = vpack.c.bf16 %v847, %v846
        %v862 = vpack.c.bf16 %v849, %v848
        %v863 = vpack.c.bf16 %v851, %v850
        %v864 = vpack.c.bf16 %v853, %v852
        %v865 = vpack.c.bf16 %v855, %v854
        %v866 = vpack.c.bf16 %v857, %v856
        %v867 = vpack.c.bf16 %v859, %v858
        %v868 = vld [vmem:[#allocation10] sm:$0xf]
        %v869 = vld [vmem:[#allocation10 + $0x4] sm:$0xf]
        %v870 = vld [vmem:[#allocation10 + $0x8] sm:$0xf]
        %v871 = vld [vmem:[#allocation10 + $0xc] sm:$0xf]
        %v872 = vld [vmem:[#allocation10 + $0x10] sm:$0xf]
        %v873 = vld [vmem:[#allocation10 + $0x14] sm:$0xf]
        %v874 = vld [vmem:[#allocation10 + $0x18] sm:$0xf]
        %v875 = vld [vmem:[#allocation10 + $0x1c] sm:$0xf]
        %v876 = vld [vmem:[#allocation10 + $0x20] sm:$0xf]
        %v877 = vld [vmem:[#allocation10 + $0x24] sm:$0xf]
        %v878 = vld [vmem:[#allocation10 + $0x28] sm:$0xf]
        %v879 = vld [vmem:[#allocation10 + $0x2c] sm:$0xf]
        %v880 = vld [vmem:[#allocation10 + $0x30] sm:$0xf]
        %v881 = vld [vmem:[#allocation10 + $0x34] sm:$0xf]
        %v882 = vld [vmem:[#allocation10 + $0x38] sm:$0xf]
        %v883 = vld [vmem:[#allocation10 + $0x3c] sm:$0xf]
        %v884 = vld [vmem:[%s8] sm:$0x1]
        %v886 = vperm.slane %v884, 0
        %v904 = vunpack.c.l.b16 %v868
        %v905 = vunpack.c.l.b16 %v869
        %v906 = vunpack.c.l.b16 %v870
        %v907 = vunpack.c.l.b16 %v871
        %v908 = vunpack.c.l.b16 %v872
        %v909 = vunpack.c.l.b16 %v873
        %v910 = vunpack.c.l.b16 %v874
        %v911 = vunpack.c.l.b16 %v875
        %v912 = vunpack.c.l.b16 %v876
        %v913 = vunpack.c.l.b16 %v877
        %v914 = vunpack.c.l.b16 %v878
        %v915 = vunpack.c.l.b16 %v879
        %v916 = vunpack.c.l.b16 %v880
        %v917 = vunpack.c.l.b16 %v881
        %v918 = vunpack.c.l.b16 %v882
        %v919 = vunpack.c.l.b16 %v883
        %v920 = vpack.c.b16 %v905, %v904
        %v921 = vpack.c.b16 %v907, %v906
        %v922 = vpack.c.b16 %v909, %v908
        %v923 = vpack.c.b16 %v911, %v910
        %v924 = vpack.c.b16 %v913, %v912
        %v925 = vpack.c.b16 %v915, %v914
        %v926 = vpack.c.b16 %v917, %v916
        %v927 = vpack.c.b16 %v919, %v918
        %936 = vmatpush.bf16.msra.mxu0 %v927
        %937 = vmatpush.bf16.msra.mxu0 %v926
        %938 = vmatpush.bf16.msra.mxu0 %v925
        %939 = vmatpush.bf16.msra.mxu0 %v924
        %940 = vmatpush.bf16.msra.mxu0 %v923
        %941 = vmatpush.bf16.msra.mxu0 %v922
        %942 = vmatpush.bf16.msra.mxu0 %v921
        %943 = vmatpush.bf16.msra.mxu0 %v920
        %944 = vmatmul.bf16.gmra.mxu0 %v860
        %v945 = vpop.f32.mrf.mxu0
        %v946 = vadd.f32 %v886, %v945
        %v947 = vpop.f32.mrf.mxu0
        %v948 = vadd.f32 %v886, %v947
        %949 = vmatmul.bf16.gmra.mxu0 %v861
        %v950 = vpop.f32.mrf.mxu0
        %v951 = vadd.f32 %v886, %v950
        %v952 = vpop.f32.mrf.mxu0
        %v953 = vadd.f32 %v886, %v952
        %954 = vmatmul.bf16.gmra.mxu0 %v862
        %v955 = vpop.f32.mrf.mxu0
        %v956 = vadd.f32 %v886, %v955
        %v957 = vpop.f32.mrf.mxu0
        %v958 = vadd.f32 %v886, %v957
        %959 = vmatmul.bf16.gmra.mxu0 %v863
        %v960 = vpop.f32.mrf.mxu0
        %v961 = vadd.f32 %v886, %v960
        %v962 = vpop.f32.mrf.mxu0
        %v963 = vadd.f32 %v886, %v962
        %964 = vmatmul.bf16.gmra.mxu0 %v864
        %v965 = vpop.f32.mrf.mxu0
        %v966 = vadd.f32 %v886, %v965
        %v967 = vpop.f32.mrf.mxu0
        %v968 = vadd.f32 %v886, %v967
        %969 = vmatmul.bf16.gmra.mxu0 %v865
        %v970 = vpop.f32.mrf.mxu0
        %v971 = vadd.f32 %v886, %v970
        %v972 = vpop.f32.mrf.mxu0
        %v973 = vadd.f32 %v886, %v972
        %974 = vmatmul.bf16.gmra.mxu0 %v866
        %v975 = vpop.f32.mrf.mxu0
        %v976 = vadd.f32 %v886, %v975
        %v977 = vpop.f32.mrf.mxu0
        %v978 = vadd.f32 %v886, %v977
        %979 = vmatmul.bf16.gmra.mxu0 %v867
        %v980 = vpop.f32.mrf.mxu0
        %v981 = vadd.f32 %v886, %v980
        %v982 = vpop.f32.mrf.mxu0
        %v983 = vadd.f32 %v886, %v982
        %984 = vdwg.mxu0
        %v985 = vxor.u32 %v946, 2147483648
        %v986 = vxor.u32 %v948, 2147483648
        %v987 = vxor.u32 %v951, 2147483648
        %v988 = vxor.u32 %v953, 2147483648
        %v989 = vxor.u32 %v956, 2147483648
        %v990 = vxor.u32 %v958, 2147483648
        %v991 = vxor.u32 %v961, 2147483648
        %v992 = vxor.u32 %v963, 2147483648
        %v993 = vxor.u32 %v966, 2147483648
        %v994 = vxor.u32 %v968, 2147483648
        %v995 = vxor.u32 %v971, 2147483648
        %v996 = vxor.u32 %v973, 2147483648
        %v997 = vxor.u32 %v976, 2147483648
        %v998 = vxor.u32 %v978, 2147483648
        %v999 = vxor.u32 %v981, 2147483648
        %v1000 = vxor.u32 %v983, 2147483648
        %v1001 = vmul.f32 %v985, 1.442695
        %v1002 = vpow.pop %v1001
        %v1003 = vmul.f32 %v986, 1.442695
        %v1004 = vpow.pop %v1003
        %v1005 = vmul.f32 %v987, 1.442695
        %v1006 = vpow.pop %v1005
        %v1007 = vmul.f32 %v988, 1.442695
        %v1008 = vpow.pop %v1007
        %v1009 = vmul.f32 %v989, 1.442695
        %v1010 = vpow.pop %v1009
        %v1011 = vmul.f32 %v990, 1.442695
        %v1012 = vpow.pop %v1011
        %v1013 = vmul.f32 %v991, 1.442695
        %v1014 = vpow.pop %v1013
        %v1015 = vmul.f32 %v992, 1.442695
        %v1016 = vpow.pop %v1015
        %v1017 = vmul.f32 %v993, 1.442695
        %v1018 = vpow.pop %v1017
        %v1019 = vmul.f32 %v994, 1.442695
        %v1020 = vpow.pop %v1019
        %v1021 = vmul.f32 %v995, 1.442695
        %v1022 = vpow.pop %v1021
        %v1023 = vmul.f32 %v996, 1.442695
        %v1024 = vpow.pop %v1023
        %v1025 = vmul.f32 %v997, 1.442695
        %v1026 = vpow.pop %v1025
        %v1027 = vmul.f32 %v998, 1.442695
        %v1028 = vpow.pop %v1027
        %v1029 = vmul.f32 %v999, 1.442695
        %v1030 = vpow.pop %v1029
        %v1031 = vmul.f32 %v1000, 1.442695
        %v1032 = vpow.pop %v1031
        %v1033 = vadd.f32 %v1002, 1.0
        %v1034 = vadd.f32 %v1004, 1.0
        %v1035 = vadd.f32 %v1006, 1.0
        %v1036 = vadd.f32 %v1008, 1.0
        %v1037 = vadd.f32 %v1010, 1.0
        %v1038 = vadd.f32 %v1012, 1.0
        %v1039 = vadd.f32 %v1014, 1.0
        %v1040 = vadd.f32 %v1016, 1.0
        %v1041 = vadd.f32 %v1018, 1.0
        %v1042 = vadd.f32 %v1020, 1.0
        %v1043 = vadd.f32 %v1022, 1.0
        %v1044 = vadd.f32 %v1024, 1.0
        %v1045 = vadd.f32 %v1026, 1.0
        %v1046 = vadd.f32 %v1028, 1.0
        %v1047 = vadd.f32 %v1030, 1.0
        %v1048 = vadd.f32 %v1032, 1.0
        %v1049 = vrcp.pop %v1033
        %v1050 = vmul.f32 %v1033, %v1049
        %v1051 = vsub.f32 1.0, %v1050
        %v1052 = vmul.f32 %v1049, %v1051
        %v1053 = vadd.f32 %v1049, %v1052
        %vm1054 = vweird.f32 %v1033
        %vm1055 = vweird.f32 %v1049
        %vm1056 = vmor %vm1054, %vm1055
        %v1057 = vsel %vm1056, %v1049, %v1053
        %v1058 = vand.u32 2147483647, %v1033
        %vm1059 = vcmp.eq.f32.partialorder %v1058, 8.507059e+37
        %v1060 = vand.u32 %v1033, 2147483648
        %v1061 = vor.u32 1.1754944e-38, %v1060
        %v1062 = vsel %vm1059, %v1061, %v1057
        %v1063 = vmul.f32 1.0, %v1062
        %v1064 = vrcp.pop %v1034
        %v1065 = vmul.f32 %v1034, %v1064
        %v1066 = vsub.f32 1.0, %v1065
        %v1067 = vmul.f32 %v1064, %v1066
        %v1068 = vadd.f32 %v1064, %v1067
        %vm1069 = vweird.f32 %v1034
        %vm1070 = vweird.f32 %v1064
        %vm1071 = vmor %vm1069, %vm1070
        %v1072 = vsel %vm1071, %v1064, %v1068
        %v1073 = vand.u32 2147483647, %v1034
        %vm1074 = vcmp.eq.f32.partialorder %v1073, 8.507059e+37
        %v1075 = vand.u32 %v1034, 2147483648
        %v1076 = vor.u32 1.1754944e-38, %v1075
        %v1077 = vsel %vm1074, %v1076, %v1072
        %v1078 = vmul.f32 1.0, %v1077
        %v1079 = vrcp.pop %v1035
        %v1080 = vmul.f32 %v1035, %v1079
        %v1081 = vsub.f32 1.0, %v1080
        %v1082 = vmul.f32 %v1079, %v1081
        %v1083 = vadd.f32 %v1079, %v1082
        %vm1084 = vweird.f32 %v1035
        %vm1085 = vweird.f32 %v1079
        %vm1086 = vmor %vm1084, %vm1085
        %v1087 = vsel %vm1086, %v1079, %v1083
        %v1088 = vand.u32 2147483647, %v1035
        %vm1089 = vcmp.eq.f32.partialorder %v1088, 8.507059e+37
        %v1090 = vand.u32 %v1035, 2147483648
        %v1091 = vor.u32 1.1754944e-38, %v1090
        %v1092 = vsel %vm1089, %v1091, %v1087
        %v1093 = vmul.f32 1.0, %v1092
        %v1094 = vrcp.pop %v1036
        %v1095 = vmul.f32 %v1036, %v1094
        %v1096 = vsub.f32 1.0, %v1095
        %v1097 = vmul.f32 %v1094, %v1096
        %v1098 = vadd.f32 %v1094, %v1097
        %vm1099 = vweird.f32 %v1036
        %vm1100 = vweird.f32 %v1094
        %vm1101 = vmor %vm1099, %vm1100
        %v1102 = vsel %vm1101, %v1094, %v1098
        %v1103 = vand.u32 2147483647, %v1036
        %vm1104 = vcmp.eq.f32.partialorder %v1103, 8.507059e+37
        %v1105 = vand.u32 %v1036, 2147483648
        %v1106 = vor.u32 1.1754944e-38, %v1105
        %v1107 = vsel %vm1104, %v1106, %v1102
        %v1108 = vmul.f32 1.0, %v1107
        %v1109 = vrcp.pop %v1037
        %v1110 = vmul.f32 %v1037, %v1109
        %v1111 = vsub.f32 1.0, %v1110
        %v1112 = vmul.f32 %v1109, %v1111
        %v1113 = vadd.f32 %v1109, %v1112
        %vm1114 = vweird.f32 %v1037
        %vm1115 = vweird.f32 %v1109
        %vm1116 = vmor %vm1114, %vm1115
        %v1117 = vsel %vm1116, %v1109, %v1113
        %v1118 = vand.u32 2147483647, %v1037
        %vm1119 = vcmp.eq.f32.partialorder %v1118, 8.507059e+37
        %v1120 = vand.u32 %v1037, 2147483648
        %v1121 = vor.u32 1.1754944e-38, %v1120
        %v1122 = vsel %vm1119, %v1121, %v1117
        %v1123 = vmul.f32 1.0, %v1122
        %v1124 = vrcp.pop %v1038
        %v1125 = vmul.f32 %v1038, %v1124
        %v1126 = vsub.f32 1.0, %v1125
        %v1127 = vmul.f32 %v1124, %v1126
        %v1128 = vadd.f32 %v1124, %v1127
        %vm1129 = vweird.f32 %v1038
        %vm1130 = vweird.f32 %v1124
        %vm1131 = vmor %vm1129, %vm1130
        %v1132 = vsel %vm1131, %v1124, %v1128
        %v1133 = vand.u32 2147483647, %v1038
        %vm1134 = vcmp.eq.f32.partialorder %v1133, 8.507059e+37
        %v1135 = vand.u32 %v1038, 2147483648
        %v1136 = vor.u32 1.1754944e-38, %v1135
        %v1137 = vsel %vm1134, %v1136, %v1132
        %v1138 = vmul.f32 1.0, %v1137
        %v1139 = vrcp.pop %v1039
        %v1140 = vmul.f32 %v1039, %v1139
        %v1141 = vsub.f32 1.0, %v1140
        %v1142 = vmul.f32 %v1139, %v1141
        %v1143 = vadd.f32 %v1139, %v1142
        %vm1144 = vweird.f32 %v1039
        %vm1145 = vweird.f32 %v1139
        %vm1146 = vmor %vm1144, %vm1145
        %v1147 = vsel %vm1146, %v1139, %v1143
        %v1148 = vand.u32 2147483647, %v1039
        %vm1149 = vcmp.eq.f32.partialorder %v1148, 8.507059e+37
        %v1150 = vand.u32 %v1039, 2147483648
        %v1151 = vor.u32 1.1754944e-38, %v1150
        %v1152 = vsel %vm1149, %v1151, %v1147
        %v1153 = vmul.f32 1.0, %v1152
        %v1154 = vrcp.pop %v1040
        %v1155 = vmul.f32 %v1040, %v1154
        %v1156 = vsub.f32 1.0, %v1155
        %v1157 = vmul.f32 %v1154, %v1156
        %v1158 = vadd.f32 %v1154, %v1157
        %vm1159 = vweird.f32 %v1040
        %vm1160 = vweird.f32 %v1154
        %vm1161 = vmor %vm1159, %vm1160
        %v1162 = vsel %vm1161, %v1154, %v1158
        %v1163 = vand.u32 2147483647, %v1040
        %vm1164 = vcmp.eq.f32.partialorder %v1163, 8.507059e+37
        %v1165 = vand.u32 %v1040, 2147483648
        %v1166 = vor.u32 1.1754944e-38, %v1165
        %v1167 = vsel %vm1164, %v1166, %v1162
        %v1168 = vmul.f32 1.0, %v1167
        %v1169 = vrcp.pop %v1041
        %v1170 = vmul.f32 %v1041, %v1169
        %v1171 = vsub.f32 1.0, %v1170
        %v1172 = vmul.f32 %v1169, %v1171
        %v1173 = vadd.f32 %v1169, %v1172
        %vm1174 = vweird.f32 %v1041
        %vm1175 = vweird.f32 %v1169
        %vm1176 = vmor %vm1174, %vm1175
        %v1177 = vsel %vm1176, %v1169, %v1173
        %v1178 = vand.u32 2147483647, %v1041
        %vm1179 = vcmp.eq.f32.partialorder %v1178, 8.507059e+37
        %v1180 = vand.u32 %v1041, 2147483648
        %v1181 = vor.u32 1.1754944e-38, %v1180
        %v1182 = vsel %vm1179, %v1181, %v1177
        %v1183 = vmul.f32 1.0, %v1182
        %v1184 = vrcp.pop %v1042
        %v1185 = vmul.f32 %v1042, %v1184
        %v1186 = vsub.f32 1.0, %v1185
        %v1187 = vmul.f32 %v1184, %v1186
        %v1188 = vadd.f32 %v1184, %v1187
        %vm1189 = vweird.f32 %v1042
        %vm1190 = vweird.f32 %v1184
        %vm1191 = vmor %vm1189, %vm1190
        %v1192 = vsel %vm1191, %v1184, %v1188
        %v1193 = vand.u32 2147483647, %v1042
        %vm1194 = vcmp.eq.f32.partialorder %v1193, 8.507059e+37
        %v1195 = vand.u32 %v1042, 2147483648
        %v1196 = vor.u32 1.1754944e-38, %v1195
        %v1197 = vsel %vm1194, %v1196, %v1192
        %v1198 = vmul.f32 1.0, %v1197
        %v1199 = vrcp.pop %v1043
        %v1200 = vmul.f32 %v1043, %v1199
        %v1201 = vsub.f32 1.0, %v1200
        %v1202 = vmul.f32 %v1199, %v1201
        %v1203 = vadd.f32 %v1199, %v1202
        %vm1204 = vweird.f32 %v1043
        %vm1205 = vweird.f32 %v1199
        %vm1206 = vmor %vm1204, %vm1205
        %v1207 = vsel %vm1206, %v1199, %v1203
        %v1208 = vand.u32 2147483647, %v1043
        %vm1209 = vcmp.eq.f32.partialorder %v1208, 8.507059e+37
        %v1210 = vand.u32 %v1043, 2147483648
        %v1211 = vor.u32 1.1754944e-38, %v1210
        %v1212 = vsel %vm1209, %v1211, %v1207
        %v1213 = vmul.f32 1.0, %v1212
        %v1214 = vrcp.pop %v1044
        %v1215 = vmul.f32 %v1044, %v1214
        %v1216 = vsub.f32 1.0, %v1215
        %v1217 = vmul.f32 %v1214, %v1216
        %v1218 = vadd.f32 %v1214, %v1217
        %vm1219 = vweird.f32 %v1044
        %vm1220 = vweird.f32 %v1214
        %vm1221 = vmor %vm1219, %vm1220
        %v1222 = vsel %vm1221, %v1214, %v1218
        %v1223 = vand.u32 2147483647, %v1044
        %vm1224 = vcmp.eq.f32.partialorder %v1223, 8.507059e+37
        %v1225 = vand.u32 %v1044, 2147483648
        %v1226 = vor.u32 1.1754944e-38, %v1225
        %v1227 = vsel %vm1224, %v1226, %v1222
        %v1228 = vmul.f32 1.0, %v1227
        %v1229 = vrcp.pop %v1045
        %v1230 = vmul.f32 %v1045, %v1229
        %v1231 = vsub.f32 1.0, %v1230
        %v1232 = vmul.f32 %v1229, %v1231
        %v1233 = vadd.f32 %v1229, %v1232
        %vm1234 = vweird.f32 %v1045
        %vm1235 = vweird.f32 %v1229
        %vm1236 = vmor %vm1234, %vm1235
        %v1237 = vsel %vm1236, %v1229, %v1233
        %v1238 = vand.u32 2147483647, %v1045
        %vm1239 = vcmp.eq.f32.partialorder %v1238, 8.507059e+37
        %v1240 = vand.u32 %v1045, 2147483648
        %v1241 = vor.u32 1.1754944e-38, %v1240
        %v1242 = vsel %vm1239, %v1241, %v1237
        %v1243 = vmul.f32 1.0, %v1242
        %v1244 = vrcp.pop %v1046
        %v1245 = vmul.f32 %v1046, %v1244
        %v1246 = vsub.f32 1.0, %v1245
        %v1247 = vmul.f32 %v1244, %v1246
        %v1248 = vadd.f32 %v1244, %v1247
        %vm1249 = vweird.f32 %v1046
        %vm1250 = vweird.f32 %v1244
        %vm1251 = vmor %vm1249, %vm1250
        %v1252 = vsel %vm1251, %v1244, %v1248
        %v1253 = vand.u32 2147483647, %v1046
        %vm1254 = vcmp.eq.f32.partialorder %v1253, 8.507059e+37
        %v1255 = vand.u32 %v1046, 2147483648
        %v1256 = vor.u32 1.1754944e-38, %v1255
        %v1257 = vsel %vm1254, %v1256, %v1252
        %v1258 = vmul.f32 1.0, %v1257
        %v1259 = vrcp.pop %v1047
        %v1260 = vmul.f32 %v1047, %v1259
        %v1261 = vsub.f32 1.0, %v1260
        %v1262 = vmul.f32 %v1259, %v1261
        %v1263 = vadd.f32 %v1259, %v1262
        %vm1264 = vweird.f32 %v1047
        %vm1265 = vweird.f32 %v1259
        %vm1266 = vmor %vm1264, %vm1265
        %v1267 = vsel %vm1266, %v1259, %v1263
        %v1268 = vand.u32 2147483647, %v1047
        %vm1269 = vcmp.eq.f32.partialorder %v1268, 8.507059e+37
        %v1270 = vand.u32 %v1047, 2147483648
        %v1271 = vor.u32 1.1754944e-38, %v1270
        %v1272 = vsel %vm1269, %v1271, %v1267
        %v1273 = vmul.f32 1.0, %v1272
        %v1274 = vrcp.pop %v1048
        %v1275 = vmul.f32 %v1048, %v1274
        %v1276 = vsub.f32 1.0, %v1275
        %v1277 = vmul.f32 %v1274, %v1276
        %v1278 = vadd.f32 %v1274, %v1277
        %vm1279 = vweird.f32 %v1048
        %vm1280 = vweird.f32 %v1274
        %vm1281 = vmor %vm1279, %vm1280
        %v1282 = vsel %vm1281, %v1274, %v1278
        %v1283 = vand.u32 2147483647, %v1048
        %vm1284 = vcmp.eq.f32.partialorder %v1283, 8.507059e+37
        %v1285 = vand.u32 %v1048, 2147483648
        %v1286 = vor.u32 1.1754944e-38, %v1285
        %v1287 = vsel %vm1284, %v1286, %v1282
        %v1288 = vmul.f32 1.0, %v1287
        %1289 = vst [vmem:[%s418] sm:$0xff] %v1063
        %1290 = vst [vmem:[%s418 + $0x8] sm:$0xff] %v1078
        %1291 = vst [vmem:[%s418 + $0x10] sm:$0xff] %v1093
        %1292 = vst [vmem:[%s418 + $0x18] sm:$0xff] %v1108
        %1293 = vst [vmem:[%s418 + $0x20] sm:$0xff] %v1123
        %1294 = vst [vmem:[%s418 + $0x28] sm:$0xff] %v1138
        %1295 = vst [vmem:[%s418 + $0x30] sm:$0xff] %v1153
        %1296 = vst [vmem:[%s418 + $0x38] sm:$0xff] %v1168
        %1297 = vst [vmem:[%s418 + $0x40] sm:$0xff] %v1183
        %1298 = vst [vmem:[%s418 + $0x48] sm:$0xff] %v1198
        %1299 = vst [vmem:[%s418 + $0x50] sm:$0xff] %v1213
        %1300 = vst [vmem:[%s418 + $0x58] sm:$0xff] %v1228
        %1301 = vst [vmem:[%s418 + $0x60] sm:$0xff] %v1243
        %1302 = vst [vmem:[%s418 + $0x68] sm:$0xff] %v1258
        %1303 = vst [vmem:[%s418 + $0x70] sm:$0xff] %v1273
        %1304 = vst [vmem:[%s418 + $0x78] sm:$0xff] %v1288
        %s1305 = sand.u32 %s230, 1
        %s1306 = scalar_lea.sflag [#allocation4], %s1305
        %s1307 = sand.u32 %s230, 1
        %s1308 = smul.addr %s1307, 128
        %s1309 = scalar_lea.vmem [#allocation11], %s1308
        // Predicated region
        $region77: #{tpu_custom_call.1} parent=55 // pred_check
          %p1310 = pneg %p240
        $region78: #{tpu_custom_call.1} parent=55 // pred_check_branch
          %1312 = sbr.rel (%p1310) target = $region80
        $region79: #{tpu_custom_call.1} parent=55 // pred_region
          %s1313 = smul.u32 16, %s28
          %1315 = vsyncadd %s1306, 0
          %s1316 = smul.addr %s1313, 8
          %s1317 = scalar_lea.hbm %s9, %s1316
          %s1318 = sshll.u32 %s1309, 4
          %s1319 = int_to_ptr.vmem [resolvable:$true] %s1318
          %s1320 = sshll.u32 %s1317, 4
          %s1321 = int_to_ptr.hbm [resolvable:$true] %s1320
          %1326 = dma.vmem_to_hbm [thread:$0]  %s1319, 2048, %s1321, %s1306, 128, 128, 8
        $region80: #{tpu_custom_call.1} parent=55 // pred_fallthru
          _
      $region56: #{tpu_custom_call.1} parent=5 // pred_fallthru
        _
      %p1327 = scmp.le.s32.totalorder 2, %s23
      // Predicated region
      $region81: #{tpu_custom_call.1} parent=5 // pred_check
        %p1328 = pneg %p1327
      $region82: #{tpu_custom_call.1} parent=5 // pred_check_branch
        %1330 = sbr.rel (%p1328) target = $region84
      $region83: #{tpu_custom_call.1} parent=5 // pred_region
        %s1331 = ssub.s32 %s23, 2
        // Predicated region
        $region85: #{tpu_custom_call.1} parent=83 // pred_check
          %p1332 = pneg %p246
        $region86: #{tpu_custom_call.1} parent=83 // pred_check_branch
          %1334 = sbr.rel (%p1332) target = $region88
        $region87: #{tpu_custom_call.1} parent=83 // pred_region
          %s1335 = sand.u32 %s231, 1
          %s1336 = scalar_lea.sflag [#allocation4], %s1335
          %s1337 = sand.u32 %s231, 1
          %s1338 = smul.addr %s1337, 128
          %s1339 = scalar_lea.vmem [#allocation11], %s1338
          %1341 = dma.done %s1336, 2048
        $region88: #{tpu_custom_call.1} parent=83 // pred_fallthru
          _
      $region84: #{tpu_custom_call.1} parent=5 // pred_fallthru
        _
    $region6: #{tpu_custom_call.1} parent=1 // loop_footer
      %s27 = sadd.s32 1, %s23
    $region7: #{tpu_custom_call.1} parent=1 // loop_footer_branch
      %22 = sbr.rel target = $region3
    $region8: #{tpu_custom_call.1} parent=1 // loop_exit
      _
    %1342 = vsyncpa [#allocation3], 1
    %s1343 = scalar_lea.sflag [#allocation3], 1
    %1344 = vsyncpa %s1343, 1
    %1345 = vsyncpa [#allocation6], 1
    %1346 = vsyncpa [#allocation9], 1
    %1347 = vsyncpa [#allocation4], 1
    %s1348 = scalar_lea.sflag [#allocation4], 1
    %1349 = vsyncpa %s1348, 1

</llo_original>
